<compile_context>
chip_gen: v7x
topology: tpu7x:2x2x1
jax: 0.10.0
libtpu: 0.0.40
codegen_flags: <defaults>
</compile_context>

<pallas_src>
import functools

import numpy as np
import jax
import jax.numpy as jnp
from jax.experimental import pallas as pl
from jax.experimental.pallas import tpu as pltpu

_LANE = 128


def _ceil_to(x, m):
    return -(-x // m) * m


def _multiscale_gcn_kernel(*refs, scales, c_out, tile_f, fold_norm):
    """One grid step == one column tile of the packed [N, S*C_out] features.

    refs (fold_norm=True):  x_ref [N,C_in], a_hat_ref [N,N], w_ref [C_in,tile_f],
                            o_ref [N,tile_f]
    refs (fold_norm=False): x_ref, a_ref, inv_norm_ref [N,1] f32, w_ref, o_ref
    """
    if fold_norm:
        x_ref, a_ref, w_ref, o_ref = refs
        inv_ref = None
    else:
        x_ref, a_ref, inv_ref, w_ref, o_ref = refs

    j = pl.program_id(0)
    x = x_ref[...]
    a = a_ref[...]
    w = w_ref[...]

    # Fused linear over this column tile (all scales packed): one MXU matmul,
    # f32 accumulation.
    h = jnp.dot(x, w, preferred_element_type=jnp.float32)        # f32 (N, tile_f)

    # Per-column "emit at step" mask.  `scales`/`c_out` are static; only the
    # tile offset (j * tile_f) is dynamic.  Pad columns keep emit == -1.
    col = jax.lax.broadcasted_iota(jnp.int32, (1, tile_f), 1) + j * tile_f
    emit = jnp.full((1, tile_f), -1, dtype=jnp.int32)
    for idx, s_val in enumerate(scales):
        lo = idx * c_out
        in_slab = jnp.logical_and(col >= lo, col < lo + c_out)
        emit = jnp.where(in_slab, s_val, emit)

    # Step-0 emission: scale-0 slabs keep relu(X@W); padded columns are zero
    # (zero W columns) and stay zero; deeper scales get overwritten below.
    out = jnp.maximum(h, 0.0)

    if not fold_norm:
        inv_n = inv_ref[...]                                     # f32 (N, 1)

    max_s = max(scales) if scales else 0
    # Static unroll: full LLO scheduler visibility across the hot loop.
    for step in range(1, max_s + 1):
        ah = jnp.dot(a, h.astype(a.dtype),                       # bf16 MXU operands
                     preferred_element_type=jnp.float32)         # f32 accumulation
        if fold_norm:
            h = ah                                               # Â already holds +I and 1/norm
        else:
            h = (ah + h) * inv_n                                 # (N,1) lane-broadcast, no materialization
        out = jnp.where(emit == step, jnp.maximum(h, 0.0), out)

    # Single wide lane-dense store.
    o_ref[...] = out.astype(o_ref.dtype)


@functools.partial(
    jax.jit,
    static_argnames=("scales", "fold_norm", "use_bf16_matmul", "out_dtype"))
def multiscale_gcn(x, adjacency, weights, scales, fold_norm=True,
                   use_bf16_matmul=True, out_dtype=jnp.float32):
    """x: [N, C_in] f32, adjacency: [N, N] f32 (0/1), weights: [S, C_in, C_out].

    Returns [N, S*C_out] = torch.cat([GCN_s(x) for s in scales], dim=1).
    """
    N, c_in = x.shape
    S, c_in_w, c_out = weights.shape
    scales = tuple(int(s) for s in scales)
    assert S == len(scales) and S > 0 and c_in_w == c_in
    assert all(s >= 0 for s in scales)

    f_total = S * c_out

    deg = jnp.sum(adjacency, axis=1, keepdims=True)
    inv_norm = (1.0 / (deg + 1.0)).astype(jnp.float32)           # [N, 1]

    mxu_dtype = jnp.bfloat16 if use_bf16_matmul else jnp.float32
    if fold_norm:
        # Â = diag(1/norm) @ (A + I): folds residual + normalization into the
        # adjacency so the per-step kernel work is pure MXU.
        a_hat = (adjacency + jnp.eye(N, dtype=adjacency.dtype)) * inv_norm
        a_in = a_hat.astype(mxu_dtype)
    else:
        a_in = adjacency.astype(mxu_dtype)

    # Pack per-scale weights into one wide operand (torch.cat column order).
    w_all = jnp.transpose(weights, (1, 0, 2)).reshape(c_in, f_total)

    # Column tiling: lane-align (pad packed width to a 128 multiple).  When the
    # packed width is wide enough that each tile stays MXU-width-dense (>=256
    # lanes), split onto a "parallel" grid axis so v7x's 2nd TensorCore gets
    # half the columns; Â / X keep constant index_maps and stay resident.
    n_tiles = 2 if f_total >= 512 else 1
    tile_f = _ceil_to(_ceil_to(f_total, n_tiles) // n_tiles, _LANE)
    f_pad = n_tiles * tile_f
    if f_pad != f_total:
        w_all = jnp.pad(w_all, ((0, 0), (0, f_pad - f_total)))
    w_in = w_all.astype(mxu_dtype)
    x_in = x.astype(mxu_dtype)

    # Generation-aware VMEM budget: actual resident bytes x 1.3, clamped to
    # the chip's per-core capacity (v5e/v6e 128 MiB, v7x 64 MiB) minus margin.
    mxu_bytes = jnp.dtype(mxu_dtype).itemsize
    out_bytes = jnp.dtype(out_dtype).itemsize
    est = (N * N * mxu_bytes * (2 if n_tiles > 1 else 1)   # Â (2x if pipelined)
           + 2 * (N * c_in * mxu_bytes                     # X (double-buffered)
                  + c_in * tile_f * mxu_bytes              # W tile
                  + N * tile_f * out_bytes)                # out tile
           + 4 * N * tile_f * 4                            # h / ah / out f32 + bf16 copy
           + (0 if fold_norm else N * _LANE * 4))          # (N,1) norm lane-pads
    try:
        vmem_cap = int(pltpu.get_tpu_info().vmem_capacity_bytes)
    except Exception:                                       # pragma: no cover
        vmem_cap = 64 << 20                                 # safe on every gen
    vmem_limit = int(min(max(int(est * 1.3), 32 << 20), int(vmem_cap * 0.9)))
    # TODO(synk): if bf16 Â alone exceeds this budget, switch to the streaming
    # path (Â in HBM via memory_space=pl.ANY, h resident in VMEM scratch,
    # double-buffered row tiles of Â per propagation step).

    kernel = functools.partial(
        _multiscale_gcn_kernel,
        scales=scales, c_out=c_out, tile_f=tile_f, fold_norm=fold_norm)

    const_map = lambda j: (0, 0)
    in_specs = [
        pl.BlockSpec((N, c_in), const_map),                 # X (resident)
        pl.BlockSpec((N, N), const_map),                    # Â / A (resident)
    ]
    inputs = [x_in, a_in]
    if not fold_norm:
        in_specs.append(pl.BlockSpec((N, 1), const_map))    # 1/norm
        inputs.append(inv_norm)
    in_specs.append(pl.BlockSpec((c_in, tile_f), lambda j: (0, j)))   # W tile
    inputs.append(w_in)

    out = pl.pallas_call(
        kernel,
        out_shape=jax.ShapeDtypeStruct((N, f_pad), out_dtype),
        grid=(n_tiles,),
        in_specs=in_specs,
        out_specs=pl.BlockSpec((N, tile_f), lambda j: (0, j)),
        compiler_params=pltpu.CompilerParams(
            dimension_semantics=("parallel",),
            vmem_limit_bytes=vmem_limit),
    )(*inputs)

    return out[:, :f_total]


def _reference(x, adjacency, weights, scales, mxu_dtype=jnp.float32,
               fold_norm=False):
    """Pure-JAX reference mirroring the PyTorch per-scale loop."""
    N = x.shape[0]
    deg = jnp.sum(adjacency, axis=1, keepdims=True)
    inv_norm = (1.0 / (deg + 1.0)).astype(jnp.float32)
    if fold_norm:
        a = ((adjacency + jnp.eye(N, dtype=adjacency.dtype))
             * inv_norm).astype(mxu_dtype)
    else:
        a = adjacency.astype(mxu_dtype)
    outs = []
    for idx, s in enumerate(scales):
        h = jnp.dot(x.astype(mxu_dtype), weights[idx].astype(mxu_dtype),
                    preferred_element_type=jnp.float32)
        for _ in range(int(s)):
            ah = jnp.dot(a, h.astype(mxu_dtype),
                         preferred_element_type=jnp.float32)
            h = ah if fold_norm else (ah + h) * inv_norm
        outs.append(jnp.maximum(h, 0.0))
    return jnp.concatenate(outs, axis=1)


def _make_inputs(key, n, c_in, c_out, n_scales):
    k_x, k_a, k_w = jax.random.split(key, 3)
    x = jax.random.normal(k_x, (n, c_in), jnp.float32)
    # random symmetric 0/1 adjacency, no self loops
    a_upper = (jax.random.uniform(k_a, (n, n)) < 0.1).astype(jnp.float32)
    adjacency = jnp.triu(a_upper, k=1)
    adjacency = adjacency + adjacency.T
    # per-scale Linear(in, out, bias=False) weights
    bound = float(1.0 / np.sqrt(c_in))
    w_keys = jax.random.split(k_w, n_scales)
    weights = jnp.stack([
        jax.random.uniform(wk, (c_in, c_out), jnp.float32, -bound, bound)
        for wk in w_keys
    ])
    return x, adjacency, weights


if __name__ == "__main__":
    root = jax.random.PRNGKey(0)
    key1, key2 = jax.random.split(root)

    # Case 1: F = 96 (padded to one 128-lane tile); exercise both norm paths.
    SCALES = (1, 2, 3)
    N, C_IN, C_OUT = 64, 32, 32
    x, adj, w = _make_inputs(key1, N, C_IN, C_OUT, len(SCALES))
    for fold in (True, False):
        out = jax.block_until_ready(
            multiscale_gcn(x, adj, w, SCALES, fold_norm=fold))
        assert out.shape == (N, len(SCALES) * C_OUT), out.shape
        ref_m = _reference(x, adj, w, SCALES, mxu_dtype=jnp.bfloat16,
                           fold_norm=fold)
        assert jnp.allclose(out, ref_m, atol=2e-3, rtol=2e-3), \
            f"mismatch vs matched-precision reference (fold_norm={fold})"
        ref_f = _reference(x, adj, w, SCALES, mxu_dtype=jnp.float32,
                           fold_norm=False)
        assert jnp.allclose(out, ref_f, atol=5e-2, rtol=5e-2), \
            f"mismatch vs f32 reference (fold_norm={fold})"

    # Case 2: wide packed features (F = 512) -> 2 column tiles on a "parallel"
    # grid (megacore split on v7x); also exercises scale 0.
    SCALES2 = (0, 1, 2, 3)
    N2, C_IN2, C_OUT2 = 64, 16, 128
    x2, adj2, w2 = _make_inputs(key2, N2, C_IN2, C_OUT2, len(SCALES2))
    out2 = jax.block_until_ready(multiscale_gcn(x2, adj2, w2, SCALES2))
    assert out2.shape == (N2, len(SCALES2) * C_OUT2), out2.shape
    ref2_m = _reference(x2, adj2, w2, SCALES2, mxu_dtype=jnp.bfloat16,
                        fold_norm=True)
    assert jnp.allclose(out2, ref2_m, atol=2e-3, rtol=2e-3), \
        "mismatch vs matched-precision reference (tiled case)"
    ref2_f = _reference(x2, adj2, w2, SCALES2, mxu_dtype=jnp.float32,
                        fold_norm=False)
    assert jnp.allclose(out2, ref2_f, atol=5e-2, rtol=5e-2), \
        "mismatch vs f32 reference (tiled case)"

    print("KERNEL_OK")
</pallas_src>

<mosaic_0001>
module attributes {stable_mosaic.version = 11 : i64} {
  func.func @_multiscale_gcn_kernel(%arg0: i32, %arg1: memref<64x32xbf16, #tpu.memory_space<vmem>>, %arg2: memref<64x64xbf16, #tpu.memory_space<vmem>>, %arg3: memref<32x128xbf16, #tpu.memory_space<vmem>>, %arg4: memref<64x128xf32, #tpu.memory_space<vmem>>) attributes {dimension_semantics = [#tpu.dimension_semantics<parallel>], iteration_bounds = array<i64: 1>, scalar_prefetch = 0 : i64, scratch_operands = 0 : i64, tpu.core_type = #tpu.core_type<tc>, window_params = [{pipeline_mode = #tpu.pipeline_mode<synchronous>, transform_indices = @transform_0, window_bounds = array<i64: 64, 32>}, {pipeline_mode = #tpu.pipeline_mode<synchronous>, transform_indices = @transform_1, window_bounds = array<i64: 64, 64>}, {transform_indices = @transform_2, window_bounds = array<i64: 32, 128>}, {transform_indices = @transform_3, window_bounds = array<i64: 64, 128>}]} {
    %c0 = arith.constant 0 : index
    %c0_0 = arith.constant 0 : index
    %0 = vector.load %arg1[%c0, %c0_0] : memref<64x32xbf16, #tpu.memory_space<vmem>>, vector<64x32xbf16>
    %c0_1 = arith.constant 0 : index
    %c0_2 = arith.constant 0 : index
    %1 = vector.load %arg2[%c0_1, %c0_2] : memref<64x64xbf16, #tpu.memory_space<vmem>>, vector<64x64xbf16>
    %c0_3 = arith.constant 0 : index
    %c0_4 = arith.constant 0 : index
    %2 = vector.load %arg3[%c0_3, %c0_4] : memref<32x128xbf16, #tpu.memory_space<vmem>>, vector<32x128xbf16>
    %cst = arith.constant dense<0.000000e+00> : vector<64x128xf32>
    %3 = tpu.matmul %0, %2, %cst {dimension_numbers = #tpu.dot_dimension_numbers<[1], [0], [0], [1], [0, 0, 1, 1], [], []>} : vector<64x32xbf16>, vector<32x128xbf16>, vector<64x128xf32> -> vector<64x128xf32>
    %4 = tpu.iota {dimensions = array<i32: 1>} : vector<1x128xi32>
    %c128_i32 = arith.constant 128 : i32
    %5 = arith.muli %arg0, %c128_i32 : i32
    %6 = vector.broadcast %5 : i32 to vector<1x128xi32>
    %7 = arith.addi %4, %6 : vector<1x128xi32>
    %c-1_i32 = arith.constant -1 : i32
    %8 = vector.broadcast %c-1_i32 : i32 to vector<1x128xi32>
    %c0_i32 = arith.constant 0 : i32
    %9 = vector.broadcast %c0_i32 : i32 to vector<1x128xi32>
    %10 = arith.cmpi sge, %7, %9 : vector<1x128xi32>
    %c32_i32 = arith.constant 32 : i32
    %11 = vector.broadcast %c32_i32 : i32 to vector<1x128xi32>
    %12 = arith.cmpi slt, %7, %11 : vector<1x128xi32>
    %13 = arith.andi %10, %12 : vector<1x128xi1>
    %c1_i32 = arith.constant 1 : i32
    %14 = vector.broadcast %c1_i32 : i32 to vector<1x128xi32>
    %15 = arith.select %13, %14, %8 : vector<1x128xi1>, vector<1x128xi32>
    %c32_i32_5 = arith.constant 32 : i32
    %16 = vector.broadcast %c32_i32_5 : i32 to vector<1x128xi32>
    %17 = arith.cmpi sge, %7, %16 : vector<1x128xi32>
    %c64_i32 = arith.constant 64 : i32
    %18 = vector.broadcast %c64_i32 : i32 to vector<1x128xi32>
    %19 = arith.cmpi slt, %7, %18 : vector<1x128xi32>
    %20 = arith.andi %17, %19 : vector<1x128xi1>
    %c2_i32 = arith.constant 2 : i32
    %21 = vector.broadcast %c2_i32 : i32 to vector<1x128xi32>
    %22 = arith.select %20, %21, %15 : vector<1x128xi1>, vector<1x128xi32>
    %c64_i32_6 = arith.constant 64 : i32
    %23 = vector.broadcast %c64_i32_6 : i32 to vector<1x128xi32>
    %24 = arith.cmpi sge, %7, %23 : vector<1x128xi32>
    %c96_i32 = arith.constant 96 : i32
    %25 = vector.broadcast %c96_i32 : i32 to vector<1x128xi32>
    %26 = arith.cmpi slt, %7, %25 : vector<1x128xi32>
    %27 = arith.andi %24, %26 : vector<1x128xi1>
    %c3_i32 = arith.constant 3 : i32
    %28 = vector.broadcast %c3_i32 : i32 to vector<1x128xi32>
    %29 = arith.select %27, %28, %22 : vector<1x128xi1>, vector<1x128xi32>
    %cst_7 = arith.constant 0.000000e+00 : f32
    %30 = vector.broadcast %cst_7 : f32 to vector<64x128xf32>
    %31 = arith.maximumf %3, %30 : vector<64x128xf32>
    %32 = arith.truncf %3 : vector<64x128xf32> to vector<64x128xbf16>
    %cst_8 = arith.constant dense<0.000000e+00> : vector<64x128xf32>
    %33 = tpu.matmul %1, %32, %cst_8 {dimension_numbers = #tpu.dot_dimension_numbers<[1], [0], [0], [1], [0, 0, 1, 1], [], []>} : vector<64x64xbf16>, vector<64x128xbf16>, vector<64x128xf32> -> vector<64x128xf32>
    %c1_i32_9 = arith.constant 1 : i32
    %34 = vector.broadcast %c1_i32_9 : i32 to vector<1x128xi32>
    %35 = arith.cmpi eq, %29, %34 : vector<1x128xi32>
    %cst_10 = arith.constant 0.000000e+00 : f32
    %36 = vector.broadcast %cst_10 : f32 to vector<64x128xf32>
    %37 = arith.maximumf %33, %36 : vector<64x128xf32>
    %38 = vector.shape_cast %35 : vector<1x128xi1> to vector<1x128xi1>
    %39 = vector.broadcast %38 : vector<1x128xi1> to vector<64x128xi1>
    %40 = arith.select %39, %37, %31 : vector<64x128xi1>, vector<64x128xf32>
    %41 = arith.truncf %33 : vector<64x128xf32> to vector<64x128xbf16>
    %cst_11 = arith.constant dense<0.000000e+00> : vector<64x128xf32>
    %42 = tpu.matmul %1, %41, %cst_11 {dimension_numbers = #tpu.dot_dimension_numbers<[1], [0], [0], [1], [0, 0, 1, 1], [], []>} : vector<64x64xbf16>, vector<64x128xbf16>, vector<64x128xf32> -> vector<64x128xf32>
    %c2_i32_12 = arith.constant 2 : i32
    %43 = vector.broadcast %c2_i32_12 : i32 to vector<1x128xi32>
    %44 = arith.cmpi eq, %29, %43 : vector<1x128xi32>
    %cst_13 = arith.constant 0.000000e+00 : f32
    %45 = vector.broadcast %cst_13 : f32 to vector<64x128xf32>
    %46 = arith.maximumf %42, %45 : vector<64x128xf32>
    %47 = vector.shape_cast %44 : vector<1x128xi1> to vector<1x128xi1>
    %48 = vector.broadcast %47 : vector<1x128xi1> to vector<64x128xi1>
    %49 = arith.select %48, %46, %40 : vector<64x128xi1>, vector<64x128xf32>
    %50 = arith.truncf %42 : vector<64x128xf32> to vector<64x128xbf16>
    %cst_14 = arith.constant dense<0.000000e+00> : vector<64x128xf32>
    %51 = tpu.matmul %1, %50, %cst_14 {dimension_numbers = #tpu.dot_dimension_numbers<[1], [0], [0], [1], [0, 0, 1, 1], [], []>} : vector<64x64xbf16>, vector<64x128xbf16>, vector<64x128xf32> -> vector<64x128xf32>
    %c3_i32_15 = arith.constant 3 : i32
    %52 = vector.broadcast %c3_i32_15 : i32 to vector<1x128xi32>
    %53 = arith.cmpi eq, %29, %52 : vector<1x128xi32>
    %cst_16 = arith.constant 0.000000e+00 : f32
    %54 = vector.broadcast %cst_16 : f32 to vector<64x128xf32>
    %55 = arith.maximumf %51, %54 : vector<64x128xf32>
    %56 = vector.shape_cast %53 : vector<1x128xi1> to vector<1x128xi1>
    %57 = vector.broadcast %56 : vector<1x128xi1> to vector<64x128xi1>
    %58 = arith.select %57, %55, %49 : vector<64x128xi1>, vector<64x128xf32>
    %c0_17 = arith.constant 0 : index
    %c0_18 = arith.constant 0 : index
    %59 = vector.load %arg4[%c0_17, %c0_18] : memref<64x128xf32, #tpu.memory_space<vmem>>, vector<64x128xf32>
    tpu.vector_store %arg4[%c0_17, %c0_18], %58 {strides = array<i32>} : memref<64x128xf32, #tpu.memory_space<vmem>>, vector<64x128xf32>,
    return
  }
  func.func @transform_0(%arg0: i32) -> (i32, i32) {
    %c0_i32 = arith.constant 0 : i32
    %c0_i32_0 = arith.constant 0 : i32
    %c0_i32_1 = arith.constant 0 : i32
    return %c0_i32, %c0_i32_0 : i32, i32
  }
  func.func @transform_1(%arg0: i32) -> (i32, i32) {
    %c0_i32 = arith.constant 0 : i32
    %c0_i32_0 = arith.constant 0 : i32
    %c0_i32_1 = arith.constant 0 : i32
    return %c0_i32, %c0_i32_0 : i32, i32
  }
  func.func @transform_2(%arg0: i32) -> (i32, i32) {
    %c0_i32 = arith.constant 0 : i32
    %c0_i32_0 = arith.constant 0 : i32
    return %c0_i32, %arg0 : i32, i32
  }
  func.func @transform_3(%arg0: i32) -> (i32, i32) {
    %c0_i32 = arith.constant 0 : i32
    %c0_i32_0 = arith.constant 0 : i32
    return %c0_i32, %arg0 : i32, i32
  }
}

</mosaic_0001>

<llo_original>
// kernel: multiscale_gcn.1
$region0: #{multiscale_gcn.1}
  #allocation0 [shape = 'u32[]', space=smem, size = 0x4, offset = 0x4, fixed_abs, tag = 'smem constant byte address 0x4 - core index']
  #allocation1 [shape = 'u32[144,128]{1,0:T(1,128)}', space=vmem, size = 0x12000, scoped, tag = 'internal scratch']
  %s0 = inlined_call_operand.vmem [shape: bf16[64,32], index: 0, kind: input, shape index: {}]
  %s1 = inlined_call_operand.vmem [shape: bf16[64,64], index: 1, kind: input, shape index: {}]
  %s2 = inlined_call_operand.vmem [shape: bf16[32,128], index: 2, kind: input, shape index: {}]
  %s3 = inlined_call_operand.hbm [shape: f32[64,128], index: 3, kind: output, shape index: {}]
  %s4 = sld [smem:[#allocation0]]
  $region22: #{multiscale_gcn.1} parent=0
    _
  %s6 = ssub.s32 1, %s4
  %s7 = scalar_select 0, %s6, %s4
  $region1: #{multiscale_gcn.1} parent=0
    #allocation2 [shape = 'u8[32768]{0}', space=vmem, size = 0x8000, scoped, tag = 'output window, operand 0, single buffered']
    #allocation3 [shape = 's32[1]{0}', space=sflag, size = 0x4, scoped, tag = 'scoped memory for multiscale_gcn.1']
    %8 = vsyncpa [#allocation3], 0
    // Predicated region
    $region2: #{multiscale_gcn.1} parent=1 // pred_check
      _
    $region3: #{multiscale_gcn.1} parent=1 // pred_check_branch
      %10 = sbr.rel (0) target = $region5
    $region4: #{multiscale_gcn.1} parent=1 // pred_region
      _
    $region5: #{multiscale_gcn.1} parent=1 // pred_fallthru
      _
    // Predicated region
    $region6: #{multiscale_gcn.1} parent=1 // pred_check
      _
    $region7: #{multiscale_gcn.1} parent=1 // pred_check_branch
      %12 = sbr.rel (0) target = $region9
    $region8: #{multiscale_gcn.1} parent=1 // pred_region
      _
    $region9: #{multiscale_gcn.1} parent=1 // pred_fallthru
      _
    // Predicated region
    $region10: #{multiscale_gcn.1} parent=1 // pred_check
      _
    $region11: #{multiscale_gcn.1} parent=1 // pred_check_branch
      %14 = sbr.rel (0) target = $region13
    $region12: #{multiscale_gcn.1} parent=1 // pred_region
      _
    $region13: #{multiscale_gcn.1} parent=1 // pred_fallthru
      _
    %v16 = vld [vmem:[%s0] sm:$0xf]
    %v17 = vld [vmem:[%s0 + $0x4] sm:$0xf]
    %v18 = vld [vmem:[%s0 + $0x8] sm:$0xf]
    %v19 = vld [vmem:[%s0 + $0xc] sm:$0xf]
    %v20 = vld [vmem:[%s0 + $0x10] sm:$0xf]
    %v21 = vld [vmem:[%s0 + $0x14] sm:$0xf]
    %v22 = vld [vmem:[%s0 + $0x18] sm:$0xf]
    %v23 = vld [vmem:[%s0 + $0x1c] sm:$0xf]
    %v24 = vld [vmem:[%s1] sm:$0xf]
    %v25 = vld [vmem:[%s1 + $0x4] sm:$0xf]
    %v26 = vld [vmem:[%s1 + $0x8] sm:$0xf]
    %v27 = vld [vmem:[%s1 + $0xc] sm:$0xf]
    %v28 = vld [vmem:[%s1 + $0x10] sm:$0xf]
    %v29 = vld [vmem:[%s1 + $0x14] sm:$0xf]
    %v30 = vld [vmem:[%s1 + $0x18] sm:$0xf]
    %v31 = vld [vmem:[%s1 + $0x1c] sm:$0xf]
    %v32 = vld [vmem:[%s2] sm:$0xf]
    %v33 = vld [vmem:[%s2 + $0x4] sm:$0xf]
    %v34 = vld [vmem:[%s2 + $0x8] sm:$0xf]
    %v35 = vld [vmem:[%s2 + $0xc] sm:$0xf]
    %v44 = vunpack.c.l.b16 %v16
    %v45 = vunpack.c.l.b16 %v17
    %v46 = vunpack.c.l.b16 %v18
    %v47 = vunpack.c.l.b16 %v19
    %v48 = vunpack.c.l.b16 %v20
    %v49 = vunpack.c.l.b16 %v21
    %v50 = vunpack.c.l.b16 %v22
    %v51 = vunpack.c.l.b16 %v23
    %v52 = vpack.c.b16 %v45, %v44
    %v53 = vpack.c.b16 %v47, %v46
    %v54 = vpack.c.b16 %v49, %v48
    %v55 = vpack.c.b16 %v51, %v50
    %v60 = vunpack.c.l.b16 %v32
    %v61 = vunpack.c.l.b16 %v33
    %v62 = vunpack.c.l.b16 %v34
    %v63 = vunpack.c.l.b16 %v35
    %v64 = vpack.c.b16 %v61, %v60
    %v65 = vpack.c.b16 %v63, %v62
    %vm68 = vcmask 261120
    %v70 = vsel %vm68, %v52, 0
    %v73 = vsel %vm68, %v53, 0
    %v76 = vsel %vm68, %v54, 0
    %v79 = vsel %vm68, %v55, 0
    %81 = vmatprep.subr.bf16.mxu0 0
    %82 = vmatpush1.bf16.msra.mxu0 %v64
    %83 = vmatprep.subr.bf16.mxu0 0
    %84 = vmatpush1.bf16.msra.mxu0 %v65
    %85 = vmatprep.subr.bf16.mxu0 0
    %86 = vmatpush1.bf16.msra.mxu0 0
    %87 = vmatprep.subr.bf16.mxu0 0
    %88 = vmatpush1.bf16.msra.mxu0 0
    %89 = vmatprep.subr.bf16.mxu0 0
    %90 = vmatpush1.bf16.msra.mxu0 0
    %91 = vmatprep.subr.bf16.mxu0 0
    %92 = vmatpush1.bf16.msra.mxu0 0
    %93 = vmatprep.subr.bf16.mxu0 0
    %94 = vmatpush1.bf16.msra.mxu0 0
    %95 = vmatprep.subr.bf16.mxu0 0
    %96 = vmatpush1.bf16.msra.mxu0 0
    %97 = vmatprep.subr.bf16.mxu0 0
    %98 = vmatpush1.bf16.msra.mxu0 0
    %99 = vmatprep.subr.bf16.mxu0 0
    %100 = vmatpush1.bf16.msra.mxu0 0
    %101 = vmatprep.subr.bf16.mxu0 0
    %102 = vmatpush1.bf16.msra.mxu0 0
    %103 = vmatprep.subr.bf16.mxu0 0
    %104 = vmatpush1.bf16.msra.mxu0 0
    %105 = vmatprep.subr.bf16.mxu0 0
    %106 = vmatpush1.bf16.msra.mxu0 0
    %107 = vmatprep.subr.bf16.mxu0 0
    %108 = vmatpush1.bf16.msra.mxu0 0
    %109 = vmatprep.subr.bf16.mxu0 0
    %110 = vmatpush1.bf16.msra.mxu0 0
    %111 = vmatprep.subr.bf16.mxu0 0
    %112 = vmatpush1.bf16.msra.mxu0 0
    %113 = vmatprep.mubr.bf16.mxu0 0
    %114 = vmatmul.mubr.bf16.gmra.mrb[0].mxu0 %v70
    %v115 = vpop.f32.mrb[0].mxu0
    %v116 = vadd.f32 0.0, %v115
    %v117 = vpop.f32.mrb[0].mxu0
    %v118 = vpop.f32.mrb[0].mxu0
    %v119 = vadd.f32 0.0, %v118
    %v120 = vpop.f32.mrb[0].mxu0
    %121 = vmatprep.mubr.bf16.mxu0 0
    %122 = vmatmul.mubr.bf16.gmra.mrb[0].mxu0 %v73
    %v123 = vpop.f32.mrb[0].mxu0
    %v124 = vadd.f32 0.0, %v123
    %v125 = vpop.f32.mrb[0].mxu0
    %v126 = vpop.f32.mrb[0].mxu0
    %v127 = vadd.f32 0.0, %v126
    %v128 = vpop.f32.mrb[0].mxu0
    %129 = vmatprep.mubr.bf16.mxu0 0
    %130 = vmatmul.mubr.bf16.gmra.mrb[0].mxu0 %v76
    %v131 = vpop.f32.mrb[0].mxu0
    %v132 = vadd.f32 0.0, %v131
    %v133 = vpop.f32.mrb[0].mxu0
    %v134 = vpop.f32.mrb[0].mxu0
    %v135 = vadd.f32 0.0, %v134
    %v136 = vpop.f32.mrb[0].mxu0
    %137 = vmatprep.mubr.bf16.mxu0 0
    %138 = vmatmul.mubr.bf16.gmra.mrb[0].mxu0 %v79
    %v139 = vpop.f32.mrb[0].mxu0
    %v140 = vadd.f32 0.0, %v139
    %v141 = vpop.f32.mrb[0].mxu0
    %v142 = vpop.f32.mrb[0].mxu0
    %v143 = vadd.f32 0.0, %v142
    %v144 = vpop.f32.mrb[0].mxu0
    %145 = vdwg.mxu0
    %v146 = vlaneseq
    %v147 = vand.u32 %v146, 127
    %s148 = smul.u32 0, 128
    %v149 = vstv %s148
    %v150 = vadd.s32 %v147, %v149
    %vm151 = vcmp.ge.s32.totalorder %v150, 0
    %vm152 = vcmp.lt.s32.totalorder %v150, 32
    %vm153 = vmand %vm151, %vm152
    %v154 = vsel %vm153, 1, 4294967295
    %vm155 = vcmp.ge.s32.totalorder %v150, 32
    %vm156 = vcmp.lt.s32.totalorder %v150, 64
    %vm157 = vmand %vm155, %vm156
    %v158 = vsel %vm157, 2, %v154
    %vm159 = vcmp.ge.s32.totalorder %v150, 64
    %vm160 = vcmp.lt.s32.totalorder %v150, 96
    %vm161 = vmand %vm159, %vm160
    %v162 = vsel %vm161, 3, %v158
    %v163 = vmax.f32 %v116, 0.0
    %v164 = vmax.f32 %v119, 0.0
    %v165 = vmax.f32 %v124, 0.0
    %v166 = vmax.f32 %v127, 0.0
    %v167 = vmax.f32 %v132, 0.0
    %v168 = vmax.f32 %v135, 0.0
    %v169 = vmax.f32 %v140, 0.0
    %v170 = vmax.f32 %v143, 0.0
    %v171 = vpack.c.bf16 %v119, %v116
    %v172 = vpack.c.bf16 %v127, %v124
    %v173 = vpack.c.bf16 %v135, %v132
    %v174 = vpack.c.bf16 %v143, %v140
    %v183 = vunpack.c.l.b16 %v24
    %v184 = vunpack.c.l.b16 %v25
    %v185 = vunpack.c.l.b16 %v26
    %v186 = vunpack.c.l.b16 %v27
    %v187 = vunpack.c.l.b16 %v28
    %v188 = vunpack.c.l.b16 %v29
    %v189 = vunpack.c.l.b16 %v30
    %v190 = vunpack.c.l.b16 %v31
    %v191 = vpack.c.b16 %v184, %v183
    %v192 = vpack.c.b16 %v186, %v185
    %v193 = vpack.c.b16 %v188, %v187
    %v194 = vpack.c.b16 %v190, %v189
    %vm195 = vcmask 523264
    %v197 = vsel %vm195, %v191, 0
    %v200 = vsel %vm195, %v192, 0
    %v203 = vsel %vm195, %v193, 0
    %v206 = vsel %vm195, %v194, 0
    %208 = vmatprep.subr.bf16.mxu0 0
    %209 = vmatpush1.bf16.msra.mxu0 %v171
    %210 = vmatprep.subr.bf16.mxu0 0
    %211 = vmatpush1.bf16.msra.mxu0 %v172
    %212 = vmatprep.subr.bf16.mxu0 0
    %213 = vmatpush1.bf16.msra.mxu0 %v173
    %214 = vmatprep.subr.bf16.mxu0 0
    %215 = vmatpush1.bf16.msra.mxu0 %v174
    %216 = vmatprep.subr.bf16.mxu0 0
    %217 = vmatpush1.bf16.msra.mxu0 0
    %218 = vmatprep.subr.bf16.mxu0 0
    %219 = vmatpush1.bf16.msra.mxu0 0
    %220 = vmatprep.subr.bf16.mxu0 0
    %221 = vmatpush1.bf16.msra.mxu0 0
    %222 = vmatprep.subr.bf16.mxu0 0
    %223 = vmatpush1.bf16.msra.mxu0 0
    %224 = vmatprep.subr.bf16.mxu0 0
    %225 = vmatpush1.bf16.msra.mxu0 0
    %226 = vmatprep.subr.bf16.mxu0 0
    %227 = vmatpush1.bf16.msra.mxu0 0
    %228 = vmatprep.subr.bf16.mxu0 0
    %229 = vmatpush1.bf16.msra.mxu0 0
    %230 = vmatprep.subr.bf16.mxu0 0
    %231 = vmatpush1.bf16.msra.mxu0 0
    %232 = vmatprep.subr.bf16.mxu0 0
    %233 = vmatpush1.bf16.msra.mxu0 0
    %234 = vmatprep.subr.bf16.mxu0 0
    %235 = vmatpush1.bf16.msra.mxu0 0
    %236 = vmatprep.subr.bf16.mxu0 0
    %237 = vmatpush1.bf16.msra.mxu0 0
    %238 = vmatprep.subr.bf16.mxu0 0
    %239 = vmatpush1.bf16.msra.mxu0 0
    %240 = vmatprep.mubr.bf16.mxu0 0
    %241 = vmatmul.mubr.bf16.gmra.mrb[0].mxu0 %v197
    %v242 = vpop.f32.mrb[0].mxu0
    %v243 = vadd.f32 0.0, %v242
    %v244 = vpop.f32.mrb[0].mxu0
    %v245 = vpop.f32.mrb[0].mxu0
    %v246 = vadd.f32 0.0, %v245
    %v247 = vpop.f32.mrb[0].mxu0
    %248 = vmatprep.mubr.bf16.mxu0 0
    %249 = vmatmul.mubr.bf16.gmra.mrb[0].mxu0 %v200
    %v250 = vpop.f32.mrb[0].mxu0
    %v251 = vadd.f32 0.0, %v250
    %v252 = vpop.f32.mrb[0].mxu0
    %v253 = vpop.f32.mrb[0].mxu0
    %v254 = vadd.f32 0.0, %v253
    %v255 = vpop.f32.mrb[0].mxu0
    %256 = vmatprep.mubr.bf16.mxu0 0
    %257 = vmatmul.mubr.bf16.gmra.mrb[0].mxu0 %v203
    %v258 = vpop.f32.mrb[0].mxu0
    %v259 = vadd.f32 0.0, %v258
    %v260 = vpop.f32.mrb[0].mxu0
    %v261 = vpop.f32.mrb[0].mxu0
    %v262 = vadd.f32 0.0, %v261
    %v263 = vpop.f32.mrb[0].mxu0
    %264 = vmatprep.mubr.bf16.mxu0 0
    %265 = vmatmul.mubr.bf16.gmra.mrb[0].mxu0 %v206
    %v266 = vpop.f32.mrb[0].mxu0
    %v267 = vadd.f32 0.0, %v266
    %v268 = vpop.f32.mrb[0].mxu0
    %v269 = vpop.f32.mrb[0].mxu0
    %v270 = vadd.f32 0.0, %v269
    %v271 = vpop.f32.mrb[0].mxu0
    %272 = vdwg.mxu0
    %vm273 = vcmp.eq.s32.totalorder %v162, 1
    %v274 = vmax.f32 %v243, 0.0
    %v275 = vmax.f32 %v246, 0.0
    %v276 = vmax.f32 %v251, 0.0
    %v277 = vmax.f32 %v254, 0.0
    %v278 = vmax.f32 %v259, 0.0
    %v279 = vmax.f32 %v262, 0.0
    %v280 = vmax.f32 %v267, 0.0
    %v281 = vmax.f32 %v270, 0.0
    %v282 = vsel %vm273, 1, 0
    %vm283 = vcmp.eq.s32.totalorder %v282, 1
    %v284 = vsel %vm283, %v274, %v163
    %v285 = vsel %vm283, %v275, %v164
    %v286 = vsel %vm283, %v276, %v165
    %v287 = vsel %vm283, %v277, %v166
    %v288 = vsel %vm283, %v278, %v167
    %v289 = vsel %vm283, %v279, %v168
    %v290 = vsel %vm283, %v280, %v169
    %v291 = vsel %vm283, %v281, %v170
    %v292 = vpack.c.bf16 %v246, %v243
    %v293 = vpack.c.bf16 %v254, %v251
    %v294 = vpack.c.bf16 %v262, %v259
    %v295 = vpack.c.bf16 %v270, %v267
    %296 = vmatprep.subr.bf16.mxu0 0
    %297 = vmatpush1.bf16.msra.mxu0 %v292
    %298 = vmatprep.subr.bf16.mxu0 0
    %299 = vmatpush1.bf16.msra.mxu0 %v293
    %300 = vmatprep.subr.bf16.mxu0 0
    %301 = vmatpush1.bf16.msra.mxu0 %v294
    %302 = vmatprep.subr.bf16.mxu0 0
    %303 = vmatpush1.bf16.msra.mxu0 %v295
    %304 = vmatprep.subr.bf16.mxu0 0
    %305 = vmatpush1.bf16.msra.mxu0 0
    %306 = vmatprep.subr.bf16.mxu0 0
    %307 = vmatpush1.bf16.msra.mxu0 0
    %308 = vmatprep.subr.bf16.mxu0 0
    %309 = vmatpush1.bf16.msra.mxu0 0
    %310 = vmatprep.subr.bf16.mxu0 0
    %311 = vmatpush1.bf16.msra.mxu0 0
    %312 = vmatprep.subr.bf16.mxu0 0
    %313 = vmatpush1.bf16.msra.mxu0 0
    %314 = vmatprep.subr.bf16.mxu0 0
    %315 = vmatpush1.bf16.msra.mxu0 0
    %316 = vmatprep.subr.bf16.mxu0 0
    %317 = vmatpush1.bf16.msra.mxu0 0
    %318 = vmatprep.subr.bf16.mxu0 0
    %319 = vmatpush1.bf16.msra.mxu0 0
    %320 = vmatprep.subr.bf16.mxu0 0
    %321 = vmatpush1.bf16.msra.mxu0 0
    %322 = vmatprep.subr.bf16.mxu0 0
    %323 = vmatpush1.bf16.msra.mxu0 0
    %324 = vmatprep.subr.bf16.mxu0 0
    %325 = vmatpush1.bf16.msra.mxu0 0
    %326 = vmatprep.subr.bf16.mxu0 0
    %327 = vmatpush1.bf16.msra.mxu0 0
    %328 = vmatprep.mubr.bf16.mxu0 0
    %329 = vmatmul.mubr.bf16.gmra.mrb[0].mxu0 %v197
    %v330 = vpop.f32.mrb[0].mxu0
    %v331 = vadd.f32 0.0, %v330
    %v332 = vpop.f32.mrb[0].mxu0
    %v333 = vpop.f32.mrb[0].mxu0
    %v334 = vadd.f32 0.0, %v333
    %v335 = vpop.f32.mrb[0].mxu0
    %336 = vmatprep.mubr.bf16.mxu0 0
    %337 = vmatmul.mubr.bf16.gmra.mrb[0].mxu0 %v200
    %v338 = vpop.f32.mrb[0].mxu0
    %v339 = vadd.f32 0.0, %v338
    %v340 = vpop.f32.mrb[0].mxu0
    %v341 = vpop.f32.mrb[0].mxu0
    %v342 = vadd.f32 0.0, %v341
    %v343 = vpop.f32.mrb[0].mxu0
    %344 = vmatprep.mubr.bf16.mxu0 0
    %345 = vmatmul.mubr.bf16.gmra.mrb[0].mxu0 %v203
    %v346 = vpop.f32.mrb[0].mxu0
    %v347 = vadd.f32 0.0, %v346
    %v348 = vpop.f32.mrb[0].mxu0
    %v349 = vpop.f32.mrb[0].mxu0
    %v350 = vadd.f32 0.0, %v349
    %v351 = vpop.f32.mrb[0].mxu0
    %352 = vmatprep.mubr.bf16.mxu0 0
    %353 = vmatmul.mubr.bf16.gmra.mrb[0].mxu0 %v206
    %v354 = vpop.f32.mrb[0].mxu0
    %v355 = vadd.f32 0.0, %v354
    %v356 = vpop.f32.mrb[0].mxu0
    %v357 = vpop.f32.mrb[0].mxu0
    %v358 = vadd.f32 0.0, %v357
    %v359 = vpop.f32.mrb[0].mxu0
    %360 = vdwg.mxu0
    %vm361 = vcmp.eq.s32.totalorder %v162, 2
    %v362 = vmax.f32 %v331, 0.0
    %v363 = vmax.f32 %v334, 0.0
    %v364 = vmax.f32 %v339, 0.0
    %v365 = vmax.f32 %v342, 0.0
    %v366 = vmax.f32 %v347, 0.0
    %v367 = vmax.f32 %v350, 0.0
    %v368 = vmax.f32 %v355, 0.0
    %v369 = vmax.f32 %v358, 0.0
    %v370 = vsel %vm361, 1, 0
    %vm371 = vcmp.eq.s32.totalorder %v370, 1
    %v372 = vsel %vm371, %v362, %v284
    %v373 = vsel %vm371, %v363, %v285
    %v374 = vsel %vm371, %v364, %v286
    %v375 = vsel %vm371, %v365, %v287
    %v376 = vsel %vm371, %v366, %v288
    %v377 = vsel %vm371, %v367, %v289
    %v378 = vsel %vm371, %v368, %v290
    %v379 = vsel %vm371, %v369, %v291
    %v380 = vpack.c.bf16 %v334, %v331
    %v381 = vpack.c.bf16 %v342, %v339
    %v382 = vpack.c.bf16 %v350, %v347
    %v383 = vpack.c.bf16 %v358, %v355
    %384 = vmatprep.subr.bf16.mxu0 0
    %385 = vmatpush1.bf16.msra.mxu0 %v380
    %386 = vmatprep.subr.bf16.mxu0 0
    %387 = vmatpush1.bf16.msra.mxu0 %v381
    %388 = vmatprep.subr.bf16.mxu0 0
    %389 = vmatpush1.bf16.msra.mxu0 %v382
    %390 = vmatprep.subr.bf16.mxu0 0
    %391 = vmatpush1.bf16.msra.mxu0 %v383
    %392 = vmatprep.subr.bf16.mxu0 0
    %393 = vmatpush1.bf16.msra.mxu0 0
    %394 = vmatprep.subr.bf16.mxu0 0
    %395 = vmatpush1.bf16.msra.mxu0 0
    %396 = vmatprep.subr.bf16.mxu0 0
    %397 = vmatpush1.bf16.msra.mxu0 0
    %398 = vmatprep.subr.bf16.mxu0 0
    %399 = vmatpush1.bf16.msra.mxu0 0
    %400 = vmatprep.subr.bf16.mxu0 0
    %401 = vmatpush1.bf16.msra.mxu0 0
    %402 = vmatprep.subr.bf16.mxu0 0
    %403 = vmatpush1.bf16.msra.mxu0 0
    %404 = vmatprep.subr.bf16.mxu0 0
    %405 = vmatpush1.bf16.msra.mxu0 0
    %406 = vmatprep.subr.bf16.mxu0 0
    %407 = vmatpush1.bf16.msra.mxu0 0
    %408 = vmatprep.subr.bf16.mxu0 0
    %409 = vmatpush1.bf16.msra.mxu0 0
    %410 = vmatprep.subr.bf16.mxu0 0
    %411 = vmatpush1.bf16.msra.mxu0 0
    %412 = vmatprep.subr.bf16.mxu0 0
    %413 = vmatpush1.bf16.msra.mxu0 0
    %414 = vmatprep.subr.bf16.mxu0 0
    %415 = vmatpush1.bf16.msra.mxu0 0
    %416 = vmatprep.mubr.bf16.mxu0 0
    %417 = vmatmul.mubr.bf16.gmra.mrb[0].mxu0 %v197
    %v418 = vpop.f32.mrb[0].mxu0
    %v419 = vadd.f32 0.0, %v418
    %v420 = vpop.f32.mrb[0].mxu0
    %v421 = vpop.f32.mrb[0].mxu0
    %v422 = vadd.f32 0.0, %v421
    %v423 = vpop.f32.mrb[0].mxu0
    %424 = vmatprep.mubr.bf16.mxu0 0
    %425 = vmatmul.mubr.bf16.gmra.mrb[0].mxu0 %v200
    %v426 = vpop.f32.mrb[0].mxu0
    %v427 = vadd.f32 0.0, %v426
    %v428 = vpop.f32.mrb[0].mxu0
    %v429 = vpop.f32.mrb[0].mxu0
    %v430 = vadd.f32 0.0, %v429
    %v431 = vpop.f32.mrb[0].mxu0
    %432 = vmatprep.mubr.bf16.mxu0 0
    %433 = vmatmul.mubr.bf16.gmra.mrb[0].mxu0 %v203
    %v434 = vpop.f32.mrb[0].mxu0
    %v435 = vadd.f32 0.0, %v434
    %v436 = vpop.f32.mrb[0].mxu0
    %v437 = vpop.f32.mrb[0].mxu0
    %v438 = vadd.f32 0.0, %v437
    %v439 = vpop.f32.mrb[0].mxu0
    %440 = vmatprep.mubr.bf16.mxu0 0
    %441 = vmatmul.mubr.bf16.gmra.mrb[0].mxu0 %v206
    %v442 = vpop.f32.mrb[0].mxu0
    %v443 = vadd.f32 0.0, %v442
    %v444 = vpop.f32.mrb[0].mxu0
    %v445 = vpop.f32.mrb[0].mxu0
    %v446 = vadd.f32 0.0, %v445
    %v447 = vpop.f32.mrb[0].mxu0
    %448 = vdwg.mxu0
    %vm449 = vcmp.eq.s32.totalorder %v162, 3
    %v450 = vmax.f32 %v419, 0.0
    %v451 = vmax.f32 %v422, 0.0
    %v452 = vmax.f32 %v427, 0.0
    %v453 = vmax.f32 %v430, 0.0
    %v454 = vmax.f32 %v435, 0.0
    %v455 = vmax.f32 %v438, 0.0
    %v456 = vmax.f32 %v443, 0.0
    %v457 = vmax.f32 %v446, 0.0
    %v458 = vsel %vm449, 1, 0
    %vm459 = vcmp.eq.s32.totalorder %v458, 1
    %v460 = vsel %vm459, %v450, %v372
    %v461 = vsel %vm459, %v451, %v373
    %v462 = vsel %vm459, %v452, %v374
    %v463 = vsel %vm459, %v453, %v375
    %v464 = vsel %vm459, %v454, %v376
    %v465 = vsel %vm459, %v455, %v377
    %v466 = vsel %vm459, %v456, %v378
    %v467 = vsel %vm459, %v457, %v379
    %468 = vst [vmem:[#allocation2] sm:$0xff] %v460
    %469 = vst [vmem:[#allocation2 + $0x8] sm:$0xff] %v461
    %470 = vst [vmem:[#allocation2 + $0x10] sm:$0xff] %v462
    %471 = vst [vmem:[#allocation2 + $0x18] sm:$0xff] %v463
    %472 = vst [vmem:[#allocation2 + $0x20] sm:$0xff] %v464
    %473 = vst [vmem:[#allocation2 + $0x28] sm:$0xff] %v465
    %474 = vst [vmem:[#allocation2 + $0x30] sm:$0xff] %v466
    %475 = vst [vmem:[#allocation2 + $0x38] sm:$0xff] %v467
    // Predicated region
    $region14: #{multiscale_gcn.1} parent=1 // pred_check
      _
    $region15: #{multiscale_gcn.1} parent=1 // pred_check_branch
      %477 = sbr.rel (0) target = $region17
    $region16: #{multiscale_gcn.1} parent=1 // pred_region
      %s479 = ssub.s32 1024, 1024
      %480 = vsyncadd [#allocation3], %s479
      %s481 = sshll.u32 [#allocation2], 4
      %s482 = int_to_ptr.vmem [resolvable:$true] %s481
      %487 = dma.vmem_to_hbm [thread:$0]  %s482, 1024, %s3, [#allocation3], 128, 128, 8
    $region17: #{multiscale_gcn.1} parent=1 // pred_fallthru
      _
    // Predicated region
    $region18: #{multiscale_gcn.1} parent=1 // pred_check
      _
    $region19: #{multiscale_gcn.1} parent=1 // pred_check_branch
      %489 = sbr.rel (0) target = $region21
    $region20: #{multiscale_gcn.1} parent=1 // pred_region
      %490 = dma.done [#allocation3], 1024
    $region21: #{multiscale_gcn.1} parent=1 // pred_fallthru
      _
    %491 = vsyncpa [#allocation3], 1

</llo_original>
